<compile_context>
chip_gen: v7x
topology: tpu7x:2x2x1
jax: 0.10.0
libtpu: 0.0.40
codegen_flags: <defaults>
</compile_context>

<pallas_src>
import functools

import jax
import jax.numpy as jnp
from jax import lax
from jax.experimental import pallas as pl
from jax.experimental.pallas import tpu as pltpu


def _cdiv(a, b):
    return -(-a // b)


def _round_up(a, m):
    return _cdiv(a, m) * m


def _corr_kernel(x_ref, k_ref, o_ref, *, Hk, Wk, Wo, ho_blk):
    # x_ref: (Hx_pad, Wx, Gt), k_ref: (Hk, Wk, Gt), o_ref: (ho_blk, Wo, Gt).
    Gt = o_ref.shape[-1]
    row0 = pl.program_id(1) * ho_blk  # first output row handled by this block

    def filter_row(u, acc):
        # One aligned, lane-dense row-slab load per filter row (hoisted out of
        # the v loop); the f32 conversion happens once per slab, not per tap.
        rows = x_ref[pl.ds(row0 + u, ho_blk), :, :].astype(jnp.float32)  # (ho_blk, Wx, Gt)
        krow = k_ref[u].astype(jnp.float32)                              # (Wk, Gt)
        for v in range(Wk):                    # statically unrolled column taps
            win = rows[:, v:v + Wo, :]         # register-slab shift (XLU), no extra vld
            tap = krow[v:v + 1, :]             # (1, Gt) -> broadcast over (ho_blk, Wo)
            acc = acc + tap * win              # lane-dense VPU FMA
        return acc

    # fori_loop over filter rows bounds live ranges to one row slab + acc so
    # the accumulator stays resident in vregs (no spills) for any Hk.
    acc = lax.fori_loop(0, Hk, filter_row,
                        jnp.zeros((ho_blk, Wo, Gt), jnp.float32))
    o_ref[...] = acc.astype(o_ref.dtype)


def corr(x, kernel):
    """Depthwise cross-correlation matching Corr.forward (NCHW in / NCHW out)."""
    B, C, Hx, Wx = x.shape
    Bk, Ck, Hk, Wk = kernel.shape
    assert (B, C) == (Bk, Ck)
    assert Hk <= Hx and Wk <= Wx, "template must not exceed search region"
    Ho, Wo = Hx - Hk + 1, Wx - Wk + 1
    G = B * C

    # Channels-last: flattened group axis G goes to the lane dimension.
    x_hwg = jnp.transpose(x.reshape(G, Hx, Wx), (1, 2, 0))       # (Hx, Wx, G)
    k_hwg = jnp.transpose(kernel.reshape(G, Hk, Wk), (1, 2, 0))  # (Hk, Wk, G)

    # --- vreg-budget-driven tiling -------------------------------------------
    # Per output row, per 128 lanes of Gt (f32 vregs):
    #   accumulator slab: ceil(Wo/8) sublane tiles, live x row slab: ceil(Wx/8).
    # Budget ~48 of the 64 vregs so acc + the live window never spill.
    VREG_BUDGET = 48
    row_cost = _cdiv(Wo, 8) + _cdiv(Wx, 8)
    ho_blk = max(1, min(8, Ho, VREG_BUDGET // row_cost))
    lane_blocks = max(1, VREG_BUDGET // (ho_blk * row_cost))
    Gt = min(512, _round_up(G, 128), lane_blocks * 128)  # multiple of 128
    Gp = _round_up(G, Gt)
    num_g = Gp // Gt
    num_ho = _cdiv(Ho, ho_blk)

    # v7x has 2 TensorCores; keep the parallel grid at >=2 steps when possible.
    if num_g * num_ho == 1:
        if Ho >= 2:
            ho_blk = _cdiv(Ho, 2)
            num_ho = _cdiv(Ho, ho_blk)
        elif Gt > 128:
            Gt = 128
            Gp = _round_up(G, Gt)
            num_g = Gp // Gt

    Ho_pad = num_ho * ho_blk
    Hx_pad = Ho_pad + Hk - 1

    # Zero-pad: extra x rows so every row-slab read stays in-bounds for the
    # last Ho block, and zero groups up to a multiple of Gt on the lane axis
    # (zero taps -> zero outputs in padded lanes; both dropped on the way out).
    x_hwg = jnp.pad(x_hwg, ((0, Hx_pad - Hx), (0, 0), (0, Gp - G)))
    k_hwg = jnp.pad(k_hwg, ((0, 0), (0, 0), (0, Gp - G)))

    out_hwg = pl.pallas_call(
        functools.partial(_corr_kernel, Hk=Hk, Wk=Wk, Wo=Wo, ho_blk=ho_blk),
        out_shape=jax.ShapeDtypeStruct((Ho_pad, Wo, Gp), x.dtype),
        grid=(num_g, num_ho),
        in_specs=[
            # x block stays resident across the inner Ho sweep (index ignores j).
            pl.BlockSpec((Hx_pad, Wx, Gt), lambda g, j: (0, 0, g)),
            pl.BlockSpec((Hk, Wk, Gt), lambda g, j: (0, 0, g)),
        ],
        out_specs=pl.BlockSpec((ho_blk, Wo, Gt), lambda g, j: (j, 0, g)),
        compiler_params=pltpu.CompilerParams(
            dimension_semantics=("parallel", "parallel")),
    )(x_hwg, k_hwg)

    # Back to NCHW, dropping padded rows and padded groups.
    out = jnp.transpose(out_hwg[:Ho, :, :G], (2, 0, 1))
    return out.reshape(B, C, Ho, Wo)


def corr_reference(x, kernel):
    """Pure-JAX reference replicating F.conv2d(groups=B*C) semantics."""
    B, C, Hx, Wx = x.shape
    _, _, Hk, Wk = kernel.shape
    G = B * C
    out = lax.conv_general_dilated(
        x.reshape(1, G, Hx, Wx),
        kernel.reshape(G, 1, Hk, Wk),
        window_strides=(1, 1),
        padding="VALID",
        dimension_numbers=("NCHW", "OIHW", "NCHW"),
        feature_group_count=G,
    )
    return out.reshape(B, C, out.shape[2], out.shape[3])


if __name__ == "__main__":
    key = jax.random.PRNGKey(0)
    kx, kk = jax.random.split(key)

    B, C = 2, 4
    Hx = Wx = 16     # search feature map spatial size
    Hk = Wk = 8      # template feature map spatial size

    x = jax.random.normal(kx, (B, C, Hx, Wx), dtype=jnp.float32)
    kernel = jax.random.normal(kk, (B, C, Hk, Wk), dtype=jnp.float32)

    out = corr(x, kernel)
    out = jax.block_until_ready(out)

    ref = corr_reference(x, kernel)
    assert out.shape == (B, C, Hx - Hk + 1, Wx - Wk + 1)
    assert jnp.allclose(out, ref, atol=1e-4, rtol=1e-4)

    print("KERNEL_OK")
</pallas_src>

<mosaic_0001>
module attributes {stable_mosaic.version = 11 : i64} {
  func.func @_corr_kernel(%arg0: i32, %arg1: i32, %arg2: memref<23x16x128xf32, #tpu.memory_space<vmem>>, %arg3: memref<8x8x128xf32, #tpu.memory_space<vmem>>, %arg4: memref<8x9x128xf32, #tpu.memory_space<vmem>>) attributes {dimension_semantics = [#tpu.dimension_semantics<parallel>, #tpu.dimension_semantics<parallel>], iteration_bounds = array<i64: 1, 2>, scalar_prefetch = 0 : i64, scratch_operands = 0 : i64, tpu.core_type = #tpu.core_type<tc>, window_params = [{transform_indices = @transform_0, window_bounds = array<i64: 23, 16, 128>}, {transform_indices = @transform_1, window_bounds = array<i64: 8, 8, 128>}, {transform_indices = @transform_2, window_bounds = array<i64: 8, 9, 128>}]} {
    %c8_i32 = arith.constant 8 : i32
    %0 = arith.muli %arg1, %c8_i32 : i32
    %cst = arith.constant 0.000000e+00 : f32
    %1 = vector.broadcast %cst : f32 to vector<8x9x128xf32>
    %c0_i32 = arith.constant 0 : i32
    %c8_i32_0 = arith.constant 8 : i32
    %2 = arith.addi %c0_i32, %c8_i32_0 : i32
    %c1_i32 = arith.constant 1 : i32
    %3 = scf.for %arg5 = %c0_i32 to %2 step %c1_i32 iter_args(%arg6 = %1) -> (vector<8x9x128xf32>)  : i32 {
      %5 = arith.addi %0, %arg5 : i32
      %6 = arith.index_cast %5 : i32 to index
      %c0_4 = arith.constant 0 : index
      %c0_5 = arith.constant 0 : index
      %7 = vector.load %arg2[%6, %c0_4, %c0_5] : memref<23x16x128xf32, #tpu.memory_space<vmem>>, vector<8x16x128xf32>
      %8 = arith.index_cast %arg5 : i32 to index
      %c0_6 = arith.constant 0 : index
      %c0_7 = arith.constant 0 : index
      %9 = vector.load %arg3[%8, %c0_6, %c0_7] : memref<8x8x128xf32, #tpu.memory_space<vmem>>, vector<1x8x128xf32>
      %10 = vector.shape_cast %9 : vector<1x8x128xf32> to vector<8x128xf32>
      %11 = vector.extract_strided_slice %7 {offsets = [0, 0, 0], sizes = [8, 9, 128], strides = [1, 1, 1]} : vector<8x16x128xf32> to vector<8x9x128xf32>
      %12 = vector.extract_strided_slice %10 {offsets = [0, 0], sizes = [1, 128], strides = [1, 1]} : vector<8x128xf32> to vector<1x128xf32>
      %13 = vector.shape_cast %12 : vector<1x128xf32> to vector<1x1x128xf32>
      %14 = vector.broadcast %13 : vector<1x1x128xf32> to vector<8x9x128xf32>
      %15 = arith.mulf %14, %11 : vector<8x9x128xf32>
      %16 = arith.addf %arg6, %15 : vector<8x9x128xf32>
      %17 = vector.extract_strided_slice %7 {offsets = [0, 1, 0], sizes = [8, 9, 128], strides = [1, 1, 1]} : vector<8x16x128xf32> to vector<8x9x128xf32>
      %18 = vector.extract_strided_slice %10 {offsets = [1, 0], sizes = [1, 128], strides = [1, 1]} : vector<8x128xf32> to vector<1x128xf32>
      %19 = vector.shape_cast %18 : vector<1x128xf32> to vector<1x1x128xf32>
      %20 = vector.broadcast %19 : vector<1x1x128xf32> to vector<8x9x128xf32>
      %21 = arith.mulf %20, %17 : vector<8x9x128xf32>
      %22 = arith.addf %16, %21 : vector<8x9x128xf32>
      %23 = vector.extract_strided_slice %7 {offsets = [0, 2, 0], sizes = [8, 9, 128], strides = [1, 1, 1]} : vector<8x16x128xf32> to vector<8x9x128xf32>
      %24 = vector.extract_strided_slice %10 {offsets = [2, 0], sizes = [1, 128], strides = [1, 1]} : vector<8x128xf32> to vector<1x128xf32>
      %25 = vector.shape_cast %24 : vector<1x128xf32> to vector<1x1x128xf32>
      %26 = vector.broadcast %25 : vector<1x1x128xf32> to vector<8x9x128xf32>
      %27 = arith.mulf %26, %23 : vector<8x9x128xf32>
      %28 = arith.addf %22, %27 : vector<8x9x128xf32>
      %29 = vector.extract_strided_slice %7 {offsets = [0, 3, 0], sizes = [8, 9, 128], strides = [1, 1, 1]} : vector<8x16x128xf32> to vector<8x9x128xf32>
      %30 = vector.extract_strided_slice %10 {offsets = [3, 0], sizes = [1, 128], strides = [1, 1]} : vector<8x128xf32> to vector<1x128xf32>
      %31 = vector.shape_cast %30 : vector<1x128xf32> to vector<1x1x128xf32>
      %32 = vector.broadcast %31 : vector<1x1x128xf32> to vector<8x9x128xf32>
      %33 = arith.mulf %32, %29 : vector<8x9x128xf32>
      %34 = arith.addf %28, %33 : vector<8x9x128xf32>
      %35 = vector.extract_strided_slice %7 {offsets = [0, 4, 0], sizes = [8, 9, 128], strides = [1, 1, 1]} : vector<8x16x128xf32> to vector<8x9x128xf32>
      %36 = vector.extract_strided_slice %10 {offsets = [4, 0], sizes = [1, 128], strides = [1, 1]} : vector<8x128xf32> to vector<1x128xf32>
      %37 = vector.shape_cast %36 : vector<1x128xf32> to vector<1x1x128xf32>
      %38 = vector.broadcast %37 : vector<1x1x128xf32> to vector<8x9x128xf32>
      %39 = arith.mulf %38, %35 : vector<8x9x128xf32>
      %40 = arith.addf %34, %39 : vector<8x9x128xf32>
      %41 = vector.extract_strided_slice %7 {offsets = [0, 5, 0], sizes = [8, 9, 128], strides = [1, 1, 1]} : vector<8x16x128xf32> to vector<8x9x128xf32>
      %42 = vector.extract_strided_slice %10 {offsets = [5, 0], sizes = [1, 128], strides = [1, 1]} : vector<8x128xf32> to vector<1x128xf32>
      %43 = vector.shape_cast %42 : vector<1x128xf32> to vector<1x1x128xf32>
      %44 = vector.broadcast %43 : vector<1x1x128xf32> to vector<8x9x128xf32>
      %45 = arith.mulf %44, %41 : vector<8x9x128xf32>
      %46 = arith.addf %40, %45 : vector<8x9x128xf32>
      %47 = vector.extract_strided_slice %7 {offsets = [0, 6, 0], sizes = [8, 9, 128], strides = [1, 1, 1]} : vector<8x16x128xf32> to vector<8x9x128xf32>
      %48 = vector.extract_strided_slice %10 {offsets = [6, 0], sizes = [1, 128], strides = [1, 1]} : vector<8x128xf32> to vector<1x128xf32>
      %49 = vector.shape_cast %48 : vector<1x128xf32> to vector<1x1x128xf32>
      %50 = vector.broadcast %49 : vector<1x1x128xf32> to vector<8x9x128xf32>
      %51 = arith.mulf %50, %47 : vector<8x9x128xf32>
      %52 = arith.addf %46, %51 : vector<8x9x128xf32>
      %53 = vector.extract_strided_slice %7 {offsets = [0, 7, 0], sizes = [8, 9, 128], strides = [1, 1, 1]} : vector<8x16x128xf32> to vector<8x9x128xf32>
      %54 = vector.extract_strided_slice %10 {offsets = [7, 0], sizes = [1, 128], strides = [1, 1]} : vector<8x128xf32> to vector<1x128xf32>
      %55 = vector.shape_cast %54 : vector<1x128xf32> to vector<1x1x128xf32>
      %56 = vector.broadcast %55 : vector<1x1x128xf32> to vector<8x9x128xf32>
      %57 = arith.mulf %56, %53 : vector<8x9x128xf32>
      %58 = arith.addf %52, %57 : vector<8x9x128xf32>
      scf.yield %58 : vector<8x9x128xf32>
    }
    %c8_i32_1 = arith.constant 8 : i32
    %c0 = arith.constant 0 : index
    %c0_2 = arith.constant 0 : index
    %c0_3 = arith.constant 0 : index
    %4 = vector.load %arg4[%c0, %c0_2, %c0_3] : memref<8x9x128xf32, #tpu.memory_space<vmem>>, vector<8x9x128xf32>
    tpu.vector_store %arg4[%c0, %c0_2, %c0_3], %3 {strides = array<i32>} : memref<8x9x128xf32, #tpu.memory_space<vmem>>, vector<8x9x128xf32>,
    return
  }
  func.func @transform_0(%arg0: i32, %arg1: i32) -> (i32, i32, i32) {
    %c0_i32 = arith.constant 0 : i32
    %c0_i32_0 = arith.constant 0 : i32
    %c0_i32_1 = arith.constant 0 : i32
    return %c0_i32, %c0_i32_0, %arg0 : i32, i32, i32
  }
  func.func @transform_1(%arg0: i32, %arg1: i32) -> (i32, i32, i32) {
    %c0_i32 = arith.constant 0 : i32
    %c0_i32_0 = arith.constant 0 : i32
    %c0_i32_1 = arith.constant 0 : i32
    return %c0_i32, %c0_i32_0, %arg0 : i32, i32, i32
  }
  func.func @transform_2(%arg0: i32, %arg1: i32) -> (i32, i32, i32) {
    %c0_i32 = arith.constant 0 : i32
    %c0_i32_0 = arith.constant 0 : i32
    return %arg1, %c0_i32, %arg0 : i32, i32, i32
  }
}

</mosaic_0001>

<llo_original>
// kernel: tpu_custom_call.1
$region0: #{tpu_custom_call.1}
  #allocation0 [shape = 'u32[]', space=smem, size = 0x4, offset = 0x4, fixed_abs, tag = 'smem constant byte address 0x4 - core index']
  #allocation1 [shape = 'u32[144,128]{1,0:T(1,128)}', space=vmem, size = 0x12000, scoped, tag = 'internal scratch']
  %s0 = inlined_call_operand.hbm [shape: f32[23,16,128], index: 0, kind: input, shape index: {}]
  %s1 = inlined_call_operand.hbm [shape: f32[8,8,128], index: 1, kind: input, shape index: {}]
  %s2 = inlined_call_operand.vmem [shape: f32[16,9,128], index: 2, kind: output, shape index: {}]
  %s3 = sld [smem:[#allocation0]]
  $region56: #{tpu_custom_call.1} parent=0
    _
  %s5 = ssub.s32 1, %s3
  %s6 = scalar_select 0, %s5, %s3
  $region1: #{tpu_custom_call.1} parent=0
    #allocation2 [shape = 'u8[188416]{0}', space=vmem, size = 0x2e000, scoped, tag = 'input window, operand 0, single buffered']
    #allocation3 [shape = 's32[2]{0}', space=sflag, size = 0x8, scoped, tag = 'scoped memory for tpu_custom_call.1']
    #allocation4 [shape = 'u8[32768]{0}', space=vmem, size = 0x8000, scoped, tag = 'input window, operand 1, single buffered']
    #allocation5 [shape = 's32[1]{0}', space=sflag, size = 0x4, scoped, tag = 'scoped memory for tpu_custom_call.1']
    %7 = vsyncpa [#allocation3], 0
    %8 = vsyncpa [#allocation5], 0
    loop: start=0, step=1, limit=4
    $region2: #{tpu_custom_call.1} parent=1 // loop_pre_header
      _
    $region3: #{tpu_custom_call.1} parent=1 // loop_header
      %s10 = sphi 0, %s14
      %p11 = scmp.ge.s32.totalorder %s10, 4
      %s17 = sphi 0, %s29
      %s18 = sphi 0, %s25
      %s19 = sphi 0, %s17
      %s20 = sphi 0, %s18
      %s21 = sphi 0, %s19
      %s22 = sphi 0, %s20
      %s32 = sphi 0, %s34
      %s35 = sphi 0, %s32
      %s36 = sphi 0, %s35
      %s52 = sphi 0, %s36
      %s58 = sphi 0, %s60
      %s61 = sphi 0, %s58
      %s62 = sphi 0, %s61
      %s78 = sphi 0, %s62
      %s86 = sphi 0, %s88
      %s89 = sphi 0, %s86
      %s90 = sphi 0, %s89
      %s106 = sphi 0, %s90
    $region4: #{tpu_custom_call.1} parent=1 // loop_header_branch
      %13 = sbr.rel (%p11) target = $region8
    $region5: #{tpu_custom_call.1} parent=1 // loop_body
      %s15 = ssub.s32 %s10, 1
      %s16 = ssub.s32 %s10, 2
      %s23 = sadd.s32 1, %s18
      %p24 = scmp.ge.s32.totalorder %s23, 2
      %s25 = scalar_select %p24, 0, %s23
      %s26 = sadd.s32 1, %s17
      %s27 = scalar_select %p24, %s26, %s17
      %p28 = scmp.ge.s32.totalorder %s27, 1
      %s29 = scalar_select %p28, 0, %s27
      %s30 = ssub.s32 %s17, %s29
      %p31 = scmp.eq.s32.totalorder %s30, 0
      %s33 = sadd.s32 %s32, 1
      %s34 = scalar_select %p31, %s32, %s33
      %p37 = pneg %p31
      %p38 = scmp.eq.s32.totalorder %s10, 1
      %p39 = por %p37, %p38
      %p40 = scmp.ne.s32.totalorder %s32, %s35
      %p41 = scmp.eq.s32.totalorder %s10, 0
      %p42 = por %p40, %p41
      %p43 = scmp.ne.s32.totalorder %s32, %s35
      %p44 = scmp.eq.s32.totalorder %s15, 1
      %p45 = por %p43, %p44
      %p46 = scmp.ne.s32.totalorder %s35, %s36
      %p47 = scmp.eq.s32.totalorder %s15, 0
      %p48 = por %p46, %p47
      %p49 = scmp.ne.s32.totalorder %s35, %s36
      %p50 = scmp.eq.s32.totalorder %s16, 1
      %p51 = por %p49, %p50
      %p53 = scmp.ne.s32.totalorder %s36, %s52
      %p54 = scmp.eq.s32.totalorder %s16, 0
      %p55 = por %p53, %p54
      %s56 = ssub.s32 %s17, %s29
      %p57 = scmp.eq.s32.totalorder %s56, 0
      %s59 = sadd.s32 %s58, 1
      %s60 = scalar_select %p57, %s58, %s59
      %p63 = pneg %p57
      %p64 = scmp.eq.s32.totalorder %s10, 1
      %p65 = por %p63, %p64
      %p66 = scmp.ne.s32.totalorder %s58, %s61
      %p67 = scmp.eq.s32.totalorder %s10, 0
      %p68 = por %p66, %p67
      %p69 = scmp.ne.s32.totalorder %s58, %s61
      %p70 = scmp.eq.s32.totalorder %s15, 1
      %p71 = por %p69, %p70
      %p72 = scmp.ne.s32.totalorder %s61, %s62
      %p73 = scmp.eq.s32.totalorder %s15, 0
      %p74 = por %p72, %p73
      %p75 = scmp.ne.s32.totalorder %s61, %s62
      %p76 = scmp.eq.s32.totalorder %s16, 1
      %p77 = por %p75, %p76
      %p79 = scmp.ne.s32.totalorder %s62, %s78
      %p80 = scmp.eq.s32.totalorder %s16, 0
      %p81 = por %p79, %p80
      %s82 = ssub.s32 %s18, %s25
      %s83 = ssub.s32 %s17, %s29
      %s84 = sor.u32 %s82, %s83
      %p85 = scmp.eq.s32.totalorder %s84, 0
      %s87 = sadd.s32 %s86, 1
      %s88 = scalar_select %p85, %s86, %s87
      %p91 = pneg %p85
      %p92 = scmp.eq.s32.totalorder %s10, 1
      %p93 = por %p91, %p92
      %p94 = scmp.ne.s32.totalorder %s86, %s89
      %p95 = scmp.eq.s32.totalorder %s10, 0
      %p96 = por %p94, %p95
      %p97 = scmp.ne.s32.totalorder %s86, %s89
      %p98 = scmp.eq.s32.totalorder %s15, 1
      %p99 = por %p97, %p98
      %p100 = scmp.ne.s32.totalorder %s89, %s90
      %p101 = scmp.eq.s32.totalorder %s15, 0
      %p102 = por %p100, %p101
      %p103 = scmp.ne.s32.totalorder %s89, %s90
      %p104 = scmp.eq.s32.totalorder %s16, 1
      %p105 = por %p103, %p104
      %p107 = scmp.ne.s32.totalorder %s90, %s106
      %p108 = scmp.eq.s32.totalorder %s16, 0
      %p109 = por %p107, %p108
      %p110 = scmp.le.s32.totalorder 1, %s10
      %p111 = scmp.lt.s32.totalorder %s10, 3
      %p112 = pnand %p110, %p111
      %p113 = pneg %p112
      // Predicated region
      $region9: #{tpu_custom_call.1} parent=5 // pred_check
        _
      $region10: #{tpu_custom_call.1} parent=5 // pred_check_branch
        %115 = sbr.rel (%p112) target = $region12
      $region11: #{tpu_custom_call.1} parent=5 // pred_region
        %s116 = ssub.s32 %s10, 1
        // Predicated region
        $region13: #{tpu_custom_call.1} parent=11 // pred_check
          %p117 = pneg %p48
        $region14: #{tpu_custom_call.1} parent=11 // pred_check_branch
          %119 = sbr.rel (%p117) target = $region16
        $region15: #{tpu_custom_call.1} parent=11 // pred_region
          %s121 = ssub.s32 5888, 5888
          %122 = vsyncadd [#allocation3], %s121
          %s123 = smul.addr %s19, 128
          %s124 = scalar_lea.hbm %s0, %s123
          %s125 = sshll.u32 [#allocation2], 4
          %s126 = int_to_ptr.vmem [resolvable:$true] %s125
          %131 = dma.hbm_to_vmem [thread:$0]  %s124, 5888, %s126, [#allocation3], 128, 128, 8
        $region16: #{tpu_custom_call.1} parent=11 // pred_fallthru
          _
        // Predicated region
        $region17: #{tpu_custom_call.1} parent=11 // pred_check
          %p132 = pneg %p74
        $region18: #{tpu_custom_call.1} parent=11 // pred_check_branch
          %134 = sbr.rel (%p132) target = $region20
        $region19: #{tpu_custom_call.1} parent=11 // pred_region
          %s136 = ssub.s32 1024, 1024
          %137 = vsyncadd [#allocation5], %s136
          %s138 = smul.addr %s19, 128
          %s139 = scalar_lea.hbm %s1, %s138
          %s140 = sshll.u32 [#allocation4], 4
          %s141 = int_to_ptr.vmem [resolvable:$true] %s140
          %146 = dma.hbm_to_vmem [thread:$0]  %s139, 1024, %s141, [#allocation5], 128, 128, 8
        $region20: #{tpu_custom_call.1} parent=11 // pred_fallthru
          _
      $region12: #{tpu_custom_call.1} parent=5 // pred_fallthru
        _
      %p147 = scmp.lt.s32.totalorder %s10, 2
      // Predicated region
      $region21: #{tpu_custom_call.1} parent=5 // pred_check
        %p148 = pneg %p147
      $region22: #{tpu_custom_call.1} parent=5 // pred_check_branch
        %150 = sbr.rel (%p148) target = $region24
      $region23: #{tpu_custom_call.1} parent=5 // pred_region
        _
      $region24: #{tpu_custom_call.1} parent=5 // pred_fallthru
        _
      %p151 = scmp.le.s32.totalorder 1, %s10
      %p152 = scmp.lt.s32.totalorder %s10, 3
      %p153 = pnand %p151, %p152
      %p154 = pneg %p153
      // Predicated region
      $region25: #{tpu_custom_call.1} parent=5 // pred_check
        _
      $region26: #{tpu_custom_call.1} parent=5 // pred_check_branch
        %156 = sbr.rel (%p153) target = $region28
      $region27: #{tpu_custom_call.1} parent=5 // pred_region
        %s157 = ssub.s32 %s10, 1
        // Predicated region
        $region29: #{tpu_custom_call.1} parent=27 // pred_check
          %p158 = pneg %p48
        $region30: #{tpu_custom_call.1} parent=27 // pred_check_branch
          %160 = sbr.rel (%p158) target = $region32
        $region31: #{tpu_custom_call.1} parent=27 // pred_region
          %161 = dma.done [#allocation3], 5888
        $region32: #{tpu_custom_call.1} parent=27 // pred_fallthru
          _
        // Predicated region
        $region33: #{tpu_custom_call.1} parent=27 // pred_check
          %p162 = pneg %p74
        $region34: #{tpu_custom_call.1} parent=27 // pred_check_branch
          %164 = sbr.rel (%p162) target = $region36
        $region35: #{tpu_custom_call.1} parent=27 // pred_region
          %165 = dma.done [#allocation5], 1024
        $region36: #{tpu_custom_call.1} parent=27 // pred_fallthru
          _
        %p166 = pneg %p48
        %p167 = pneg %p45
        %p168 = pneg %p74
        %p169 = pneg %p71
        %p170 = pneg %p102
        %p171 = pneg %p99
        %s172 = smul.u32 8, %s20
        %p173 = scmp.lt.s32.totalorder %s172, 15
        %s174 = scalar_select %p173, %s172, 15
        %p175 = scmp.lt.s32.totalorder %s19, 0
        %s176 = scalar_select %p175, %s19, 0
        %s177 = smul.addr %s174, 2
        %s178 = sadd.s32 %s176, %s177
        %s179 = smul.addr %s178, 8
        %s180 = scalar_lea.vmem %s2, %s179
        %s181 = smul.u32 8, %s20
        %p182 = scmp.lt.s32.totalorder %s181, 15
        %s183 = scalar_select %p182, %s181, 15
        %p184 = scmp.lt.s32.totalorder %s19, 0
        %s185 = scalar_select %p184, %s19, 0
        %s186 = smul.addr %s183, 2
        %s187 = sadd.s32 %s185, %s186
        %s188 = smul.addr %s187, 8
        %s189 = scalar_lea.vmem %s2, %s188
        %s190 = smul.u32 8, %s20
        %s191 = smul.u32 %s20, 8
        loop: start=0, step=1, limit=8
        $region37: #{tpu_custom_call.1} parent=27 // loop_pre_header
          _
        $region38: #{tpu_custom_call.1} parent=27 // loop_header
          %s193 = sphi 0, %s197
          %p194 = scmp.ge.s32.totalorder %s193, 8
          %v198 = vphi 0.0, %v907
          %v199 = vphi 0.0, %v908
          %v200 = vphi 0.0, %v909
          %v201 = vphi 0.0, %v910
          %v202 = vphi 0.0, %v911
          %v203 = vphi 0.0, %v912
          %v204 = vphi 0.0, %v913
          %v205 = vphi 0.0, %v914
          %v206 = vphi 0.0, %v915
          %v207 = vphi 0.0, %v916
          %v208 = vphi 0.0, %v917
          %v209 = vphi 0.0, %v918
          %v210 = vphi 0.0, %v919
          %v211 = vphi 0.0, %v920
          %v212 = vphi 0.0, %v921
          %v213 = vphi 0.0, %v922
        $region39: #{tpu_custom_call.1} parent=27 // loop_header_branch
          %196 = sbr.rel (%p194) target = $region43
        $region40: #{tpu_custom_call.1} parent=27 // loop_body
          %s214 = sadd.s32 %s191, %s193
          %s215 = smul.u32 %s214, 16
          %s216 = scalar_lea.vmem [#allocation2], %s215
          %v217 = vld [vmem:[%s216] sm:$0xff]
          %v218 = vld [vmem:[%s216 + $0x8] sm:$0xff]
          %v219 = vld [vmem:[%s216 + $0x10] sm:$0xff]
          %v220 = vld [vmem:[%s216 + $0x18] sm:$0xff]
          %v221 = vld [vmem:[%s216 + $0x20] sm:$0xff]
          %v222 = vld [vmem:[%s216 + $0x28] sm:$0xff]
          %v223 = vld [vmem:[%s216 + $0x30] sm:$0xff]
          %v224 = vld [vmem:[%s216 + $0x38] sm:$0xff]
          %v225 = vld [vmem:[%s216 + $0x40] sm:$0xff]
          %v226 = vld [vmem:[%s216 + $0x48] sm:$0xff]
          %v227 = vld [vmem:[%s216 + $0x50] sm:$0xff]
          %v228 = vld [vmem:[%s216 + $0x58] sm:$0xff]
          %v229 = vld [vmem:[%s216 + $0x60] sm:$0xff]
          %v230 = vld [vmem:[%s216 + $0x68] sm:$0xff]
          %v231 = vld [vmem:[%s216 + $0x70] sm:$0xff]
          %v232 = vld [vmem:[%s216 + $0x78] sm:$0xff]
          %s233 = smul.u32 %s193, 8
          %s234 = scalar_lea.vmem [#allocation4], %s233
          %v235 = vld [vmem:[%s234] sm:$0xff]
          %v236 = vlaneseq
          %v237 = vshrl.u32 %v236, 7
          %v238 = vsub.s32 0, %v237
          %v239 = vrot.slane %v235, %v238
          %v240 = vmul.f32 %v239, %v217
          %v241 = vmul.f32 %v239, %v218
          %v242 = vmul.f32 %v239, %v219
          %v243 = vmul.f32 %v239, %v220
          %v244 = vmul.f32 %v239, %v221
          %v245 = vmul.f32 %v239, %v222
          %v246 = vmul.f32 %v239, %v223
          %v247 = vmul.f32 %v239, %v224
          %v248 = vmul.f32 %v239, %v225
          %v249 = vmul.f32 %v239, %v226
          %v250 = vmul.f32 %v239, %v227
          %v251 = vmul.f32 %v239, %v228
          %v252 = vmul.f32 %v239, %v229
          %v253 = vmul.f32 %v239, %v230
          %v254 = vmul.f32 %v239, %v231
          %v255 = vmul.f32 %v239, %v232
          %v256 = vadd.f32 %v198, %v240
          %v257 = vadd.f32 %v199, %v241
          %v258 = vadd.f32 %v200, %v242
          %v259 = vadd.f32 %v201, %v243
          %v260 = vadd.f32 %v202, %v244
          %v261 = vadd.f32 %v203, %v245
          %v262 = vadd.f32 %v204, %v246
          %v263 = vadd.f32 %v205, %v247
          %v264 = vadd.f32 %v206, %v248
          %v265 = vadd.f32 %v207, %v249
          %v266 = vadd.f32 %v208, %v250
          %v267 = vadd.f32 %v209, %v251
          %v268 = vadd.f32 %v210, %v252
          %v269 = vadd.f32 %v211, %v253
          %v270 = vadd.f32 %v212, %v254
          %v271 = vadd.f32 %v213, %v255
          %v272 = vlaneseq
          %v273 = vshrl.u32 %v272, 7
          %v274 = vsub.s32 1, %v273
          %v275 = vrot.slane %v235, %v274
          %v276 = vmul.f32 %v275, %v217
          %v277 = vmul.f32 %v275, %v218
          %v278 = vmul.f32 %v275, %v219
          %v279 = vmul.f32 %v275, %v220
          %v280 = vmul.f32 %v275, %v221
          %v281 = vmul.f32 %v275, %v222
          %v282 = vmul.f32 %v275, %v223
          %v283 = vmul.f32 %v275, %v224
          %v284 = vmul.f32 %v275, %v225
          %v285 = vmul.f32 %v275, %v226
          %v286 = vmul.f32 %v275, %v227
          %v287 = vmul.f32 %v275, %v228
          %v288 = vmul.f32 %v275, %v229
          %v289 = vmul.f32 %v275, %v230
          %v290 = vmul.f32 %v275, %v231
          %v291 = vmul.f32 %v275, %v232
          %vm308 = vcmask 1046528
          %v309 = vrot.slane %v276, 1
          %v310 = vrot.slane %v277, 1
          %v311 = vsel %vm308, %v309, %v310
          %v312 = vrot.slane %v278, 1
          %v313 = vrot.slane %v279, 1
          %v314 = vsel %vm308, %v312, %v313
          %v315 = vrot.slane %v280, 1
          %v316 = vrot.slane %v281, 1
          %v317 = vsel %vm308, %v315, %v316
          %v318 = vrot.slane %v282, 1
          %v319 = vrot.slane %v283, 1
          %v320 = vsel %vm308, %v318, %v319
          %v321 = vrot.slane %v284, 1
          %v322 = vrot.slane %v285, 1
          %v323 = vsel %vm308, %v321, %v322
          %v324 = vrot.slane %v286, 1
          %v325 = vrot.slane %v287, 1
          %v326 = vsel %vm308, %v324, %v325
          %v327 = vrot.slane %v288, 1
          %v328 = vrot.slane %v289, 1
          %v329 = vsel %vm308, %v327, %v328
          %v330 = vrot.slane %v290, 1
          %v331 = vrot.slane %v291, 1
          %v332 = vsel %vm308, %v330, %v331
          %v349 = vadd.f32 %v256, %v311
          %v350 = vadd.f32 %v257, %v310
          %v351 = vadd.f32 %v258, %v314
          %v352 = vadd.f32 %v259, %v313
          %v353 = vadd.f32 %v260, %v317
          %v354 = vadd.f32 %v261, %v316
          %v355 = vadd.f32 %v262, %v320
          %v356 = vadd.f32 %v263, %v319
          %v357 = vadd.f32 %v264, %v323
          %v358 = vadd.f32 %v265, %v322
          %v359 = vadd.f32 %v266, %v326
          %v360 = vadd.f32 %v267, %v325
          %v361 = vadd.f32 %v268, %v329
          %v362 = vadd.f32 %v269, %v328
          %v363 = vadd.f32 %v270, %v332
          %v364 = vadd.f32 %v271, %v331
          %v365 = vlaneseq
          %v366 = vshrl.u32 %v365, 7
          %v367 = vsub.s32 2, %v366
          %v368 = vrot.slane %v235, %v367
          %v369 = vmul.f32 %v368, %v217
          %v370 = vmul.f32 %v368, %v218
          %v371 = vmul.f32 %v368, %v219
          %v372 = vmul.f32 %v368, %v220
          %v373 = vmul.f32 %v368, %v221
          %v374 = vmul.f32 %v368, %v222
          %v375 = vmul.f32 %v368, %v223
          %v376 = vmul.f32 %v368, %v224
          %v377 = vmul.f32 %v368, %v225
          %v378 = vmul.f32 %v368, %v226
          %v379 = vmul.f32 %v368, %v227
          %v380 = vmul.f32 %v368, %v228
          %v381 = vmul.f32 %v368, %v229
          %v382 = vmul.f32 %v368, %v230
          %v383 = vmul.f32 %v368, %v231
          %v384 = vmul.f32 %v368, %v232
          %vm401 = vcmask 1045504
          %v402 = vrot.slane %v369, 2
          %v403 = vrot.slane %v370, 2
          %v404 = vsel %vm401, %v402, %v403
          %v405 = vrot.slane %v371, 2
          %v406 = vrot.slane %v372, 2
          %v407 = vsel %vm401, %v405, %v406
          %v408 = vrot.slane %v373, 2
          %v409 = vrot.slane %v374, 2
          %v410 = vsel %vm401, %v408, %v409
          %v411 = vrot.slane %v375, 2
          %v412 = vrot.slane %v376, 2
          %v413 = vsel %vm401, %v411, %v412
          %v414 = vrot.slane %v377, 2
          %v415 = vrot.slane %v378, 2
          %v416 = vsel %vm401, %v414, %v415
          %v417 = vrot.slane %v379, 2
          %v418 = vrot.slane %v380, 2
          %v419 = vsel %vm401, %v417, %v418
          %v420 = vrot.slane %v381, 2
          %v421 = vrot.slane %v382, 2
          %v422 = vsel %vm401, %v420, %v421
          %v423 = vrot.slane %v383, 2
          %v424 = vrot.slane %v384, 2
          %v425 = vsel %vm401, %v423, %v424
          %v442 = vadd.f32 %v349, %v404
          %v443 = vadd.f32 %v350, %v403
          %v444 = vadd.f32 %v351, %v407
          %v445 = vadd.f32 %v352, %v406
          %v446 = vadd.f32 %v353, %v410
          %v447 = vadd.f32 %v354, %v409
          %v448 = vadd.f32 %v355, %v413
          %v449 = vadd.f32 %v356, %v412
          %v450 = vadd.f32 %v357, %v416
          %v451 = vadd.f32 %v358, %v415
          %v452 = vadd.f32 %v359, %v419
          %v453 = vadd.f32 %v360, %v418
          %v454 = vadd.f32 %v361, %v422
          %v455 = vadd.f32 %v362, %v421
          %v456 = vadd.f32 %v363, %v425
          %v457 = vadd.f32 %v364, %v424
          %v458 = vlaneseq
          %v459 = vshrl.u32 %v458, 7
          %v460 = vsub.s32 3, %v459
          %v461 = vrot.slane %v235, %v460
          %v462 = vmul.f32 %v461, %v217
          %v463 = vmul.f32 %v461, %v218
          %v464 = vmul.f32 %v461, %v219
          %v465 = vmul.f32 %v461, %v220
          %v466 = vmul.f32 %v461, %v221
          %v467 = vmul.f32 %v461, %v222
          %v468 = vmul.f32 %v461, %v223
          %v469 = vmul.f32 %v461, %v224
          %v470 = vmul.f32 %v461, %v225
          %v471 = vmul.f32 %v461, %v226
          %v472 = vmul.f32 %v461, %v227
          %v473 = vmul.f32 %v461, %v228
          %v474 = vmul.f32 %v461, %v229
          %v475 = vmul.f32 %v461, %v230
          %v476 = vmul.f32 %v461, %v231
          %v477 = vmul.f32 %v461, %v232
          %vm494 = vcmask 1044480
          %v495 = vrot.slane %v462, 3
          %v496 = vrot.slane %v463, 3
          %v497 = vsel %vm494, %v495, %v496
          %v498 = vrot.slane %v464, 3
          %v499 = vrot.slane %v465, 3
          %v500 = vsel %vm494, %v498, %v499
          %v501 = vrot.slane %v466, 3
          %v502 = vrot.slane %v467, 3
          %v503 = vsel %vm494, %v501, %v502
          %v504 = vrot.slane %v468, 3
          %v505 = vrot.slane %v469, 3
          %v506 = vsel %vm494, %v504, %v505
          %v507 = vrot.slane %v470, 3
          %v508 = vrot.slane %v471, 3
          %v509 = vsel %vm494, %v507, %v508
          %v510 = vrot.slane %v472, 3
          %v511 = vrot.slane %v473, 3
          %v512 = vsel %vm494, %v510, %v511
          %v513 = vrot.slane %v474, 3
          %v514 = vrot.slane %v475, 3
          %v515 = vsel %vm494, %v513, %v514
          %v516 = vrot.slane %v476, 3
          %v517 = vrot.slane %v477, 3
          %v518 = vsel %vm494, %v516, %v517
          %v535 = vadd.f32 %v442, %v497
          %v536 = vadd.f32 %v443, %v496
          %v537 = vadd.f32 %v444, %v500
          %v538 = vadd.f32 %v445, %v499
          %v539 = vadd.f32 %v446, %v503
          %v540 = vadd.f32 %v447, %v502
          %v541 = vadd.f32 %v448, %v506
          %v542 = vadd.f32 %v449, %v505
          %v543 = vadd.f32 %v450, %v509
          %v544 = vadd.f32 %v451, %v508
          %v545 = vadd.f32 %v452, %v512
          %v546 = vadd.f32 %v453, %v511
          %v547 = vadd.f32 %v454, %v515
          %v548 = vadd.f32 %v455, %v514
          %v549 = vadd.f32 %v456, %v518
          %v550 = vadd.f32 %v457, %v517
          %v551 = vlaneseq
          %v552 = vshrl.u32 %v551, 7
          %v553 = vsub.s32 4, %v552
          %v554 = vrot.slane %v235, %v553
          %v555 = vmul.f32 %v554, %v217
          %v556 = vmul.f32 %v554, %v218
          %v557 = vmul.f32 %v554, %v219
          %v558 = vmul.f32 %v554, %v220
          %v559 = vmul.f32 %v554, %v221
          %v560 = vmul.f32 %v554, %v222
          %v561 = vmul.f32 %v554, %v223
          %v562 = vmul.f32 %v554, %v224
          %v563 = vmul.f32 %v554, %v225
          %v564 = vmul.f32 %v554, %v226
          %v565 = vmul.f32 %v554, %v227
          %v566 = vmul.f32 %v554, %v228
          %v567 = vmul.f32 %v554, %v229
          %v568 = vmul.f32 %v554, %v230
          %v569 = vmul.f32 %v554, %v231
          %v570 = vmul.f32 %v554, %v232
          %vm587 = vcmask 1043456
          %v588 = vrot.slane %v555, 4
          %v589 = vrot.slane %v556, 4
          %v590 = vsel %vm587, %v588, %v589
          %v591 = vrot.slane %v557, 4
          %v592 = vrot.slane %v558, 4
          %v593 = vsel %vm587, %v591, %v592
          %v594 = vrot.slane %v559, 4
          %v595 = vrot.slane %v560, 4
          %v596 = vsel %vm587, %v594, %v595
          %v597 = vrot.slane %v561, 4
          %v598 = vrot.slane %v562, 4
          %v599 = vsel %vm587, %v597, %v598
          %v600 = vrot.slane %v563, 4
          %v601 = vrot.slane %v564, 4
          %v602 = vsel %vm587, %v600, %v601
          %v603 = vrot.slane %v565, 4
          %v604 = vrot.slane %v566, 4
          %v605 = vsel %vm587, %v603, %v604
          %v606 = vrot.slane %v567, 4
          %v607 = vrot.slane %v568, 4
          %v608 = vsel %vm587, %v606, %v607
          %v609 = vrot.slane %v569, 4
          %v610 = vrot.slane %v570, 4
          %v611 = vsel %vm587, %v609, %v610
          %v628 = vadd.f32 %v535, %v590
          %v629 = vadd.f32 %v536, %v589
          %v630 = vadd.f32 %v537, %v593
          %v631 = vadd.f32 %v538, %v592
          %v632 = vadd.f32 %v539, %v596
          %v633 = vadd.f32 %v540, %v595
          %v634 = vadd.f32 %v541, %v599
          %v635 = vadd.f32 %v542, %v598
          %v636 = vadd.f32 %v543, %v602
          %v637 = vadd.f32 %v544, %v601
          %v638 = vadd.f32 %v545, %v605
          %v639 = vadd.f32 %v546, %v604
          %v640 = vadd.f32 %v547, %v608
          %v641 = vadd.f32 %v548, %v607
          %v642 = vadd.f32 %v549, %v611
          %v643 = vadd.f32 %v550, %v610
          %v644 = vlaneseq
          %v645 = vshrl.u32 %v644, 7
          %v646 = vsub.s32 5, %v645
          %v647 = vrot.slane %v235, %v646
          %v648 = vmul.f32 %v647, %v217
          %v649 = vmul.f32 %v647, %v218
          %v650 = vmul.f32 %v647, %v219
          %v651 = vmul.f32 %v647, %v220
          %v652 = vmul.f32 %v647, %v221
          %v653 = vmul.f32 %v647, %v222
          %v654 = vmul.f32 %v647, %v223
          %v655 = vmul.f32 %v647, %v224
          %v656 = vmul.f32 %v647, %v225
          %v657 = vmul.f32 %v647, %v226
          %v658 = vmul.f32 %v647, %v227
          %v659 = vmul.f32 %v647, %v228
          %v660 = vmul.f32 %v647, %v229
          %v661 = vmul.f32 %v647, %v230
          %v662 = vmul.f32 %v647, %v231
          %v663 = vmul.f32 %v647, %v232
          %vm680 = vcmask 1042432
          %v681 = vrot.slane %v648, 5
          %v682 = vrot.slane %v649, 5
          %v683 = vsel %vm680, %v681, %v682
          %v684 = vrot.slane %v650, 5
          %v685 = vrot.slane %v651, 5
          %v686 = vsel %vm680, %v684, %v685
          %v687 = vrot.slane %v652, 5
          %v688 = vrot.slane %v653, 5
          %v689 = vsel %vm680, %v687, %v688
          %v690 = vrot.slane %v654, 5
          %v691 = vrot.slane %v655, 5
          %v692 = vsel %vm680, %v690, %v691
          %v693 = vrot.slane %v656, 5
          %v694 = vrot.slane %v657, 5
          %v695 = vsel %vm680, %v693, %v694
          %v696 = vrot.slane %v658, 5
          %v697 = vrot.slane %v659, 5
          %v698 = vsel %vm680, %v696, %v697
          %v699 = vrot.slane %v660, 5
          %v700 = vrot.slane %v661, 5
          %v701 = vsel %vm680, %v699, %v700
          %v702 = vrot.slane %v662, 5
          %v703 = vrot.slane %v663, 5
          %v704 = vsel %vm680, %v702, %v703
          %v721 = vadd.f32 %v628, %v683
          %v722 = vadd.f32 %v629, %v682
          %v723 = vadd.f32 %v630, %v686
          %v724 = vadd.f32 %v631, %v685
          %v725 = vadd.f32 %v632, %v689
          %v726 = vadd.f32 %v633, %v688
          %v727 = vadd.f32 %v634, %v692
          %v728 = vadd.f32 %v635, %v691
          %v729 = vadd.f32 %v636, %v695
          %v730 = vadd.f32 %v637, %v694
          %v731 = vadd.f32 %v638, %v698
          %v732 = vadd.f32 %v639, %v697
          %v733 = vadd.f32 %v640, %v701
          %v734 = vadd.f32 %v641, %v700
          %v735 = vadd.f32 %v642, %v704
          %v736 = vadd.f32 %v643, %v703
          %v737 = vlaneseq
          %v738 = vshrl.u32 %v737, 7
          %v739 = vsub.s32 6, %v738
          %v740 = vrot.slane %v235, %v739
          %v741 = vmul.f32 %v740, %v217
          %v742 = vmul.f32 %v740, %v218
          %v743 = vmul.f32 %v740, %v219
          %v744 = vmul.f32 %v740, %v220
          %v745 = vmul.f32 %v740, %v221
          %v746 = vmul.f32 %v740, %v222
          %v747 = vmul.f32 %v740, %v223
          %v748 = vmul.f32 %v740, %v224
          %v749 = vmul.f32 %v740, %v225
          %v750 = vmul.f32 %v740, %v226
          %v751 = vmul.f32 %v740, %v227
          %v752 = vmul.f32 %v740, %v228
          %v753 = vmul.f32 %v740, %v229
          %v754 = vmul.f32 %v740, %v230
          %v755 = vmul.f32 %v740, %v231
          %v756 = vmul.f32 %v740, %v232
          %vm773 = vcmask 1041408
          %v774 = vrot.slane %v741, 6
          %v775 = vrot.slane %v742, 6
          %v776 = vsel %vm773, %v774, %v775
          %v777 = vrot.slane %v743, 6
          %v778 = vrot.slane %v744, 6
          %v779 = vsel %vm773, %v777, %v778
          %v780 = vrot.slane %v745, 6
          %v781 = vrot.slane %v746, 6
          %v782 = vsel %vm773, %v780, %v781
          %v783 = vrot.slane %v747, 6
          %v784 = vrot.slane %v748, 6
          %v785 = vsel %vm773, %v783, %v784
          %v786 = vrot.slane %v749, 6
          %v787 = vrot.slane %v750, 6
          %v788 = vsel %vm773, %v786, %v787
          %v789 = vrot.slane %v751, 6
          %v790 = vrot.slane %v752, 6
          %v791 = vsel %vm773, %v789, %v790
          %v792 = vrot.slane %v753, 6
          %v793 = vrot.slane %v754, 6
          %v794 = vsel %vm773, %v792, %v793
          %v795 = vrot.slane %v755, 6
          %v796 = vrot.slane %v756, 6
          %v797 = vsel %vm773, %v795, %v796
          %v814 = vadd.f32 %v721, %v776
          %v815 = vadd.f32 %v722, %v775
          %v816 = vadd.f32 %v723, %v779
          %v817 = vadd.f32 %v724, %v778
          %v818 = vadd.f32 %v725, %v782
          %v819 = vadd.f32 %v726, %v781
          %v820 = vadd.f32 %v727, %v785
          %v821 = vadd.f32 %v728, %v784
          %v822 = vadd.f32 %v729, %v788
          %v823 = vadd.f32 %v730, %v787
          %v824 = vadd.f32 %v731, %v791
          %v825 = vadd.f32 %v732, %v790
          %v826 = vadd.f32 %v733, %v794
          %v827 = vadd.f32 %v734, %v793
          %v828 = vadd.f32 %v735, %v797
          %v829 = vadd.f32 %v736, %v796
          %v830 = vlaneseq
          %v831 = vshrl.u32 %v830, 7
          %v832 = vsub.s32 7, %v831
          %v833 = vrot.slane %v235, %v832
          %v834 = vmul.f32 %v833, %v217
          %v835 = vmul.f32 %v833, %v218
          %v836 = vmul.f32 %v833, %v219
          %v837 = vmul.f32 %v833, %v220
          %v838 = vmul.f32 %v833, %v221
          %v839 = vmul.f32 %v833, %v222
          %v840 = vmul.f32 %v833, %v223
          %v841 = vmul.f32 %v833, %v224
          %v842 = vmul.f32 %v833, %v225
          %v843 = vmul.f32 %v833, %v226
          %v844 = vmul.f32 %v833, %v227
          %v845 = vmul.f32 %v833, %v228
          %v846 = vmul.f32 %v833, %v229
          %v847 = vmul.f32 %v833, %v230
          %v848 = vmul.f32 %v833, %v231
          %v849 = vmul.f32 %v833, %v232
          %vm866 = vcmask 1040384
          %v867 = vrot.slane %v834, 7
          %v868 = vrot.slane %v835, 7
          %v869 = vsel %vm866, %v867, %v868
          %v870 = vrot.slane %v836, 7
          %v871 = vrot.slane %v837, 7
          %v872 = vsel %vm866, %v870, %v871
          %v873 = vrot.slane %v838, 7
          %v874 = vrot.slane %v839, 7
          %v875 = vsel %vm866, %v873, %v874
          %v876 = vrot.slane %v840, 7
          %v877 = vrot.slane %v841, 7
          %v878 = vsel %vm866, %v876, %v877
          %v879 = vrot.slane %v842, 7
          %v880 = vrot.slane %v843, 7
          %v881 = vsel %vm866, %v879, %v880
          %v882 = vrot.slane %v844, 7
          %v883 = vrot.slane %v845, 7
          %v884 = vsel %vm866, %v882, %v883
          %v885 = vrot.slane %v846, 7
          %v886 = vrot.slane %v847, 7
          %v887 = vsel %vm866, %v885, %v886
          %v888 = vrot.slane %v848, 7
          %v889 = vrot.slane %v849, 7
          %v890 = vsel %vm866, %v888, %v889
          %v907 = vadd.f32 %v814, %v869
          %v908 = vadd.f32 %v815, %v868
          %v909 = vadd.f32 %v816, %v872
          %v910 = vadd.f32 %v817, %v871
          %v911 = vadd.f32 %v818, %v875
          %v912 = vadd.f32 %v819, %v874
          %v913 = vadd.f32 %v820, %v878
          %v914 = vadd.f32 %v821, %v877
          %v915 = vadd.f32 %v822, %v881
          %v916 = vadd.f32 %v823, %v880
          %v917 = vadd.f32 %v824, %v884
          %v918 = vadd.f32 %v825, %v883
          %v919 = vadd.f32 %v826, %v887
          %v920 = vadd.f32 %v827, %v886
          %v921 = vadd.f32 %v828, %v890
          %v922 = vadd.f32 %v829, %v889
        $region41: #{tpu_custom_call.1} parent=27 // loop_footer
          %s197 = sadd.s32 1, %s193
        $region42: #{tpu_custom_call.1} parent=27 // loop_footer_branch
          %192 = sbr.rel target = $region38
        $region43: #{tpu_custom_call.1} parent=27 // loop_exit
          _
        %923 = vst [vmem:[%s189] sm:$0xff] %v198
        %924 = vst [vmem:[%s189 + $0x8] sm:$0x1] %v199
        %925 = vst [vmem:[%s189 + $0x10] sm:$0xff] %v200
        %926 = vst [vmem:[%s189 + $0x18] sm:$0x1] %v201
        %927 = vst [vmem:[%s189 + $0x20] sm:$0xff] %v202
        %928 = vst [vmem:[%s189 + $0x28] sm:$0x1] %v203
        %929 = vst [vmem:[%s189 + $0x30] sm:$0xff] %v204
        %930 = vst [vmem:[%s189 + $0x38] sm:$0x1] %v205
        %931 = vst [vmem:[%s189 + $0x40] sm:$0xff] %v206
        %932 = vst [vmem:[%s189 + $0x48] sm:$0x1] %v207
        %933 = vst [vmem:[%s189 + $0x50] sm:$0xff] %v208
        %934 = vst [vmem:[%s189 + $0x58] sm:$0x1] %v209
        %935 = vst [vmem:[%s189 + $0x60] sm:$0xff] %v210
        %936 = vst [vmem:[%s189 + $0x68] sm:$0x1] %v211
        %937 = vst [vmem:[%s189 + $0x70] sm:$0xff] %v212
        %938 = vst [vmem:[%s189 + $0x78] sm:$0x1] %v213
        %s939 = smul.u32 8, %s20
        %p940 = scmp.lt.s32.totalorder %s939, 15
        %s941 = scalar_select %p940, %s939, 15
        %p942 = scmp.lt.s32.totalorder %s19, 0
        %s943 = scalar_select %p942, %s19, 0
        %s944 = smul.addr %s941, 2
        %s945 = sadd.s32 %s943, %s944
        %s946 = smul.addr %s945, 8
        %s947 = scalar_lea.vmem %s2, %s946
        // Predicated region
        $region44: #{tpu_custom_call.1} parent=27 // pred_check
          %p948 = pneg %p99
        $region45: #{tpu_custom_call.1} parent=27 // pred_check_branch
          %950 = sbr.rel (%p948) target = $region47
        $region46: #{tpu_custom_call.1} parent=27 // pred_region
          %s951 = smul.u32 8, %s20
        $region47: #{tpu_custom_call.1} parent=27 // pred_fallthru
          _
      $region28: #{tpu_custom_call.1} parent=5 // pred_fallthru
        _
      %p952 = scmp.le.s32.totalorder 2, %s10
      // Predicated region
      $region48: #{tpu_custom_call.1} parent=5 // pred_check
        %p953 = pneg %p952
      $region49: #{tpu_custom_call.1} parent=5 // pred_check_branch
        %955 = sbr.rel (%p953) target = $region51
      $region50: #{tpu_custom_call.1} parent=5 // pred_region
        %s956 = ssub.s32 %s10, 2
        // Predicated region
        $region52: #{tpu_custom_call.1} parent=50 // pred_check
          %p957 = pneg %p105
        $region53: #{tpu_custom_call.1} parent=50 // pred_check_branch
          %959 = sbr.rel (%p957) target = $region55
        $region54: #{tpu_custom_call.1} parent=50 // pred_region
          %s960 = smul.u32 8, %s22
          %p961 = scmp.lt.s32.totalorder %s960, 15
          %s962 = scalar_select %p961, %s960, 15
          %p963 = scmp.lt.s32.totalorder %s21, 0
          %s964 = scalar_select %p963, %s21, 0
          %s965 = smul.addr %s962, 2
          %s966 = sadd.s32 %s964, %s965
          %s967 = smul.addr %s966, 8
          %s968 = scalar_lea.vmem %s2, %s967
        $region55: #{tpu_custom_call.1} parent=50 // pred_fallthru
          _
      $region51: #{tpu_custom_call.1} parent=5 // pred_fallthru
        _
    $region6: #{tpu_custom_call.1} parent=1 // loop_footer
      %s14 = sadd.s32 1, %s10
    $region7: #{tpu_custom_call.1} parent=1 // loop_footer_branch
      %9 = sbr.rel target = $region3
    $region8: #{tpu_custom_call.1} parent=1 // loop_exit
      _
    %969 = vsyncpa [#allocation3], 1
    %s970 = scalar_lea.sflag [#allocation3], 1
    %971 = vsyncpa %s970, 1
    %972 = vsyncpa [#allocation5], 1

</llo_original>
